<compile_context>
chip_gen: v5e
topology: v5e:2x2
jax: 0.10.0
libtpu: 0.0.40
codegen_flags: <defaults>
</compile_context>

<pallas_src>
import functools

import jax
import jax.numpy as jnp
from jax import lax
from jax.experimental import pallas as pl
from jax.experimental.pallas import tpu as pltpu


_BLOCK_BUDGET_BYTES = 2 * 1024 * 1024  # padded-f32 payload budget per block


def _window_sum(xp, kernel_size, out_len, axis):
    """W[t] = sum_{j=0}^{k-1} xp[t+j] for t in [0, out_len), via binary doubling.

    Requires xp.shape[axis] >= out_len + kernel_size - 1.  Uses only static
    slices and adds (O(log2 k) steps); the decomposition is consumed LSB-first
    so at most ~4 block-sized temporaries are live at once.
    """
    acc = None
    offset = 0
    cur = xp          # running S_w[t] = sum_{j<w} xp[t+j]
    w = 1
    rem = kernel_size
    while True:
        if rem & w:
            piece = lax.slice_in_dim(cur, offset, offset + out_len, axis=axis)
            acc = piece if acc is None else acc + piece
            offset += w
            rem -= w
        if rem == 0:
            break
        new_len = cur.shape[axis] - w
        cur = (lax.slice_in_dim(cur, 0, new_len, axis=axis)
               + lax.slice_in_dim(cur, w, w + new_len, axis=axis))
        w *= 2
    return acc


def _decomp_kernel(x_ref, res_ref, mean_ref, *, kernel_size):
    """One (tb, L, tc) block: replication-padded moving mean + residual."""
    pad = (kernel_size - 1) // 2
    xf = x_ref[...].astype(jnp.float32)              # (tb, L, tc)
    tb, L, tc = xf.shape

    if pad > 0:
        first = lax.slice_in_dim(xf, 0, 1, axis=1)   # (tb, 1, tc)
        last = lax.slice_in_dim(xf, L - 1, L, axis=1)
        front = jnp.broadcast_to(first, (tb, pad, tc))
        back = jnp.broadcast_to(last, (tb, pad, tc))
        xp = jnp.concatenate([front, xf, back], axis=1)   # (tb, L+2*pad, tc)
    else:
        xp = xf

    acc = _window_sum(xp, kernel_size, out_len=L, axis=1)
    mean = acc * jnp.float32(1.0 / kernel_size)
    mean_ref[...] = mean.astype(mean_ref.dtype)
    res_ref[...] = (xf - mean).astype(res_ref.dtype)


def _padded_block_bytes(tb, L, tc, itemsize):
    """VMEM footprint of a (tb, L, tc) block after (8, 128) tile padding."""
    lanes = max(128, -(-tc // 128) * 128)
    sublanes = -(-max(L, 1) // 8) * 8
    return tb * sublanes * lanes * itemsize


def _pick_tiles(B, L, C, block_budget):
    """Pick (batch_tile, channel_tile) for a native-layout (tb, L, tc) block."""
    # Channel tile: keep the full channel axis when it fits (or when C <= 128,
    # where the (8,128) rule forbids tiling below a full/128-multiple block);
    # otherwise the largest 128-multiple within budget, preferring divisors of
    # C so no ragged trailing block is needed.
    if C <= 128 or _padded_block_bytes(1, L, C, 4) <= block_budget:
        tc = C
    else:
        groups = max(1, block_budget // _padded_block_bytes(1, L, 128, 4))
        tc = min(C // 128, groups) * 128
        for cand in range(tc, 127, -128):
            if C % cand == 0:
                tc = cand
                break
    # Batch tile: amortize the per-grid-step overhead while keeping the padded
    # f32 block within budget; prefer exact divisors of B.
    tb = max(1, block_budget // _padded_block_bytes(1, L, tc, 4))
    tb = min(tb, B)
    for cand in range(tb, 0, -1):
        if B % cand == 0:
            tb = cand
            break
    return tb, tc


def series_decomp(x, kernel_size, *, block_budget_bytes=_BLOCK_BUDGET_BYTES):
    """Returns (res, moving_mean) for x of shape (B, L, C), matching PyTorch."""
    assert kernel_size % 2 == 1, "series_decomp assumes odd kernel_size"
    B, L, C = x.shape
    itemsize = jnp.dtype(x.dtype).itemsize

    tb, tc = _pick_tiles(B, L, C, block_budget_bytes)
    grid = (pl.cdiv(B, tb), pl.cdiv(C, tc))
    block = (tb, L, tc)
    index_map = lambda b, c: (b, 0, c)

    # Advisory cost: doubling adds + combine adds + residual sub + scale mul.
    n_ops = (kernel_size.bit_length() - 1) + bin(kernel_size).count("1") + 2
    cost = pl.CostEstimate(
        flops=int(n_ops) * B * L * C,
        transcendentals=0,
        bytes_accessed=3 * B * L * C * itemsize,   # read x, write res + mean
    )

    # Scoped VMEM: double-buffered IO (1 in + 2 out) plus ~6 live block-sized
    # f32 temporaries (xf, xp, cur, acc, mean, transients), with headroom.
    io_block = _padded_block_bytes(tb, L, tc, itemsize)
    f32_block = _padded_block_bytes(tb, L, tc, 4)
    vmem_need = 2 * 3 * io_block + 6 * f32_block
    vmem_limit = int(min(max(vmem_need + (4 << 20), 16 << 20), 48 << 20))

    kern = functools.partial(_decomp_kernel, kernel_size=kernel_size)
    res, mean = pl.pallas_call(
        kern,
        out_shape=(
            jax.ShapeDtypeStruct(x.shape, x.dtype),
            jax.ShapeDtypeStruct(x.shape, x.dtype),
        ),
        grid=grid,
        in_specs=[pl.BlockSpec(block, index_map)],
        out_specs=(
            pl.BlockSpec(block, index_map),
            pl.BlockSpec(block, index_map),
        ),
        compiler_params=pltpu.CompilerParams(
            dimension_semantics=("parallel", "parallel"),
            vmem_limit_bytes=vmem_limit),
        cost_estimate=cost,
    )(x)
    return res, mean


def _reference_series_decomp(x, kernel_size):
    """Pure-JAX reference matching the PyTorch forward."""
    pad = (kernel_size - 1) // 2
    front = jnp.repeat(x[:, 0:1, :], pad, axis=1)
    end = jnp.repeat(x[:, -1:, :], pad, axis=1)
    xp = jnp.concatenate([front, x, end], axis=1)
    L = x.shape[1]
    windows = jnp.stack([xp[:, j:j + L, :] for j in range(kernel_size)], axis=0)
    mean = jnp.mean(windows, axis=0)
    return x - mean, mean


if __name__ == "__main__":
    key = jax.random.PRNGKey(0)
    # (shape, kernel_size, block_budget_override)
    cases = [
        ((2, 16, 8), 5, None),      # small-C DLinear-like, single block
        ((4, 20, 7), 7, None),      # odd C, L not a multiple of 8
        ((2, 16, 128), 5, None),    # lane-dense channel axis
        ((2, 16, 8), 1, None),      # degenerate window: mean == x, res == 0
        ((3, 16, 8), 5, 4096),      # tiny budget -> batch-tiled grid
        ((2, 16, 200), 9, 8192),    # tiny budget -> channel tiling, ragged tail
    ]
    for shape, k, budget in cases:
        key, sub = jax.random.split(key)
        x = jax.random.normal(sub, shape, dtype=jnp.float32)
        if budget is None:
            res, mean = series_decomp(x, k)
        else:
            res, mean = series_decomp(x, k, block_budget_bytes=budget)
        res = jax.block_until_ready(res)
        mean = jax.block_until_ready(mean)

        res_ref, mean_ref = _reference_series_decomp(x, k)
        assert res.shape == shape and mean.shape == shape
        assert jnp.allclose(mean, mean_ref, atol=1e-5, rtol=1e-5), (shape, k)
        assert jnp.allclose(res, res_ref, atol=1e-5, rtol=1e-5), (shape, k)

    print("KERNEL_OK")
</pallas_src>

<mosaic_0001>
module attributes {stable_mosaic.version = 11 : i64} {
  func.func @_decomp_kernel(%arg0: i32, %arg1: i32, %arg2: memref<2x16x8xf32, #tpu.memory_space<vmem>>, %arg3: memref<2x16x8xf32, #tpu.memory_space<vmem>>, %arg4: memref<2x16x8xf32, #tpu.memory_space<vmem>>) attributes {dimension_semantics = [#tpu.dimension_semantics<parallel>, #tpu.dimension_semantics<parallel>], iteration_bounds = array<i64: 1, 1>, scalar_prefetch = 0 : i64, scratch_operands = 0 : i64, tpu.core_type = #tpu.core_type<tc>, window_params = [{transform_indices = @transform_0, window_bounds = array<i64: 2, 16, 8>}, {transform_indices = @transform_1, window_bounds = array<i64: 2, 16, 8>}, {transform_indices = @transform_2, window_bounds = array<i64: 2, 16, 8>}]} {
    %c0 = arith.constant 0 : index
    %c0_0 = arith.constant 0 : index
    %c0_1 = arith.constant 0 : index
    %0 = vector.load %arg2[%c0, %c0_0, %c0_1] : memref<2x16x8xf32, #tpu.memory_space<vmem>>, vector<2x16x8xf32>
    %1 = vector.extract_strided_slice %0 {offsets = [0, 0, 0], sizes = [2, 1, 8], strides = [1, 1, 1]} : vector<2x16x8xf32> to vector<2x1x8xf32>
    %2 = vector.extract_strided_slice %0 {offsets = [0, 15, 0], sizes = [2, 1, 8], strides = [1, 1, 1]} : vector<2x16x8xf32> to vector<2x1x8xf32>
    %3 = vector.shape_cast %1 : vector<2x1x8xf32> to vector<2x1x8xf32>
    %4 = vector.broadcast %3 : vector<2x1x8xf32> to vector<2x2x8xf32>
    %5 = vector.shape_cast %2 : vector<2x1x8xf32> to vector<2x1x8xf32>
    %6 = vector.broadcast %5 : vector<2x1x8xf32> to vector<2x2x8xf32>
    %7 = tpu.concatenate %4, %0, %6 in 1 : vector<2x2x8xf32>, vector<2x16x8xf32>, vector<2x2x8xf32> -> vector<2x20x8xf32>
    %8 = vector.extract_strided_slice %7 {offsets = [0, 0, 0], sizes = [2, 16, 8], strides = [1, 1, 1]} : vector<2x20x8xf32> to vector<2x16x8xf32>
    %9 = vector.extract_strided_slice %7 {offsets = [0, 0, 0], sizes = [2, 19, 8], strides = [1, 1, 1]} : vector<2x20x8xf32> to vector<2x19x8xf32>
    %10 = vector.extract_strided_slice %7 {offsets = [0, 1, 0], sizes = [2, 19, 8], strides = [1, 1, 1]} : vector<2x20x8xf32> to vector<2x19x8xf32>
    %11 = arith.addf %9, %10 : vector<2x19x8xf32>
    %12 = vector.extract_strided_slice %11 {offsets = [0, 0, 0], sizes = [2, 17, 8], strides = [1, 1, 1]} : vector<2x19x8xf32> to vector<2x17x8xf32>
    %13 = vector.extract_strided_slice %11 {offsets = [0, 2, 0], sizes = [2, 17, 8], strides = [1, 1, 1]} : vector<2x19x8xf32> to vector<2x17x8xf32>
    %14 = arith.addf %12, %13 : vector<2x17x8xf32>
    %15 = vector.extract_strided_slice %14 {offsets = [0, 1, 0], sizes = [2, 16, 8], strides = [1, 1, 1]} : vector<2x17x8xf32> to vector<2x16x8xf32>
    %16 = arith.addf %8, %15 : vector<2x16x8xf32>
    %cst = arith.constant 2.000000e-01 : f32
    %17 = vector.broadcast %cst : f32 to vector<2x16x8xf32>
    %18 = arith.mulf %16, %17 : vector<2x16x8xf32>
    %c0_2 = arith.constant 0 : index
    %c0_3 = arith.constant 0 : index
    %c0_4 = arith.constant 0 : index
    %19 = vector.load %arg4[%c0_2, %c0_3, %c0_4] : memref<2x16x8xf32, #tpu.memory_space<vmem>>, vector<2x16x8xf32>
    tpu.vector_store %arg4[%c0_2, %c0_3, %c0_4], %18 {strides = array<i32>} : memref<2x16x8xf32, #tpu.memory_space<vmem>>, vector<2x16x8xf32>,
    %20 = arith.subf %0, %18 : vector<2x16x8xf32>
    %c0_5 = arith.constant 0 : index
    %c0_6 = arith.constant 0 : index
    %c0_7 = arith.constant 0 : index
    %21 = vector.load %arg3[%c0_5, %c0_6, %c0_7] : memref<2x16x8xf32, #tpu.memory_space<vmem>>, vector<2x16x8xf32>
    tpu.vector_store %arg3[%c0_5, %c0_6, %c0_7], %20 {strides = array<i32>} : memref<2x16x8xf32, #tpu.memory_space<vmem>>, vector<2x16x8xf32>,
    return
  }
  func.func @transform_0(%arg0: i32, %arg1: i32) -> (i32, i32, i32) {
    %c0_i32 = arith.constant 0 : i32
    %c0_i32_0 = arith.constant 0 : i32
    return %arg0, %c0_i32, %arg1 : i32, i32, i32
  }
  func.func @transform_1(%arg0: i32, %arg1: i32) -> (i32, i32, i32) {
    %c0_i32 = arith.constant 0 : i32
    %c0_i32_0 = arith.constant 0 : i32
    return %arg0, %c0_i32, %arg1 : i32, i32, i32
  }
  func.func @transform_2(%arg0: i32, %arg1: i32) -> (i32, i32, i32) {
    %c0_i32 = arith.constant 0 : i32
    %c0_i32_0 = arith.constant 0 : i32
    return %arg0, %c0_i32, %arg1 : i32, i32, i32
  }
}

</mosaic_0001>

<llo_original>
// kernel: tpu_custom_call.1
$region0: #{tpu_custom_call.1}
  #allocation0 [shape = 'u32[]', space=smem, size = 0x4, offset = 0x4, fixed_abs, tag = 'smem constant byte address 0x4 - core index']
  #allocation1 [shape = 'u32[72,128]{1,0:T(1,128)}', space=vmem, size = 0x9000, scoped, tag = 'internal scratch']
  %s0 = inlined_call_operand.vmem [shape: f32[2,16,8], index: 0, kind: input, shape index: {}]
  %s1 = inlined_call_operand.vmem [shape: f32[2,16,8], index: 1, kind: output, shape index: {0}]
  %s2 = inlined_call_operand.vmem [shape: f32[2,16,8], index: 2, kind: output, shape index: {1}]
  %3 = xla_tuple %s1, %s2
  %s4 = sld [smem:[#allocation0]]
  $region22: #{tpu_custom_call.1} parent=0
    _
  %s6 = ssub.s32 1, %s4
  %s7 = scalar_select 0, %s6, %s4
  // Predicated region
  $region2: #{tpu_custom_call.1} parent=0 // pred_check
    _
  $region3: #{tpu_custom_call.1} parent=0 // pred_check_branch
    %9 = sbr.rel (0) target = $region5
  $region4: #{tpu_custom_call.1} parent=0 // pred_region
    _
  $region5: #{tpu_custom_call.1} parent=0 // pred_fallthru
    _
  %v10 = vld [vmem:[%s0] sm:$0xff]
  %v11 = vld [vmem:[%s0 + $0x8] sm:$0xff]
  %v12 = vld [vmem:[%s0 + $0x10] sm:$0xff]
  %v13 = vld [vmem:[%s0 + $0x18] sm:$0xff]
  %v14 = vperm.slane %v10, 0
  %v15 = vperm.slane %v12, 0
  %v16 = vperm.slane %v11, 7
  %v17 = vperm.slane %v13, 7
  %vm22 = vcmask 1041408
  %v23 = vrot.slane %v10, 6
  %v24 = vrot.slane %v11, 6
  %v25 = vsel %vm22, %v23, %v24
  %v26 = vrot.slane %v12, 6
  %v27 = vrot.slane %v13, 6
  %v28 = vsel %vm22, %v26, %v27
  %v35 = vsel %vm22, %v14, %v23
  %v36 = vsel %vm22, %v15, %v26
  %v37 = vsel %vm22, %v24, %v16
  %v38 = vsel %vm22, %v27, %v17
  %vm43 = vcmask 1046528
  %v44 = vrot.slane %v35, 1
  %v45 = vrot.slane %v25, 1
  %v46 = vsel %vm43, %v44, %v45
  %v47 = vrot.slane %v37, 1
  %v48 = vsel %vm43, %v45, %v47
  %v49 = vrot.slane %v36, 1
  %v50 = vrot.slane %v28, 1
  %v51 = vsel %vm43, %v49, %v50
  %v52 = vrot.slane %v38, 1
  %v53 = vsel %vm43, %v50, %v52
  %v60 = vadd.f32 %v35, %v46
  %v61 = vadd.f32 %v25, %v48
  %v62 = vadd.f32 %v37, %v47
  %v63 = vadd.f32 %v36, %v51
  %v64 = vadd.f32 %v28, %v53
  %v65 = vadd.f32 %v38, %v52
  %vm72 = vcmask 1045504
  %v73 = vrot.slane %v60, 2
  %v74 = vrot.slane %v61, 2
  %v75 = vsel %vm72, %v73, %v74
  %v76 = vrot.slane %v62, 2
  %v77 = vsel %vm72, %v74, %v76
  %v78 = vrot.slane %v63, 2
  %v79 = vrot.slane %v64, 2
  %v80 = vsel %vm72, %v78, %v79
  %v81 = vrot.slane %v65, 2
  %v82 = vsel %vm72, %v79, %v81
  %v89 = vadd.f32 %v60, %v75
  %v90 = vadd.f32 %v61, %v77
  %v91 = vadd.f32 %v62, %v76
  %v92 = vadd.f32 %v63, %v80
  %v93 = vadd.f32 %v64, %v82
  %v94 = vadd.f32 %v65, %v81
  %v101 = vrot.slane %v89, 1
  %v102 = vrot.slane %v90, 1
  %v103 = vsel %vm43, %v101, %v102
  %v104 = vrot.slane %v91, 1
  %v105 = vsel %vm43, %v102, %v104
  %v106 = vrot.slane %v92, 1
  %v107 = vrot.slane %v93, 1
  %v108 = vsel %vm43, %v106, %v107
  %v109 = vrot.slane %v94, 1
  %v110 = vsel %vm43, %v107, %v109
  %v115 = vadd.f32 %v35, %v103
  %v116 = vadd.f32 %v25, %v105
  %v117 = vadd.f32 %v36, %v108
  %v118 = vadd.f32 %v28, %v110
  %v119 = vmul.f32 %v115, 0.2
  %v120 = vmul.f32 %v116, 0.2
  %v121 = vmul.f32 %v117, 0.2
  %v122 = vmul.f32 %v118, 0.2
  %vm123 = vcmask 64512
  %124 = vst.msk [vmem:[%s2] sm:$0xff] %vm123, %v119
  %125 = vst.msk [vmem:[%s2 + $0x8] sm:$0xff] %vm123, %v120
  %126 = vst.msk [vmem:[%s2 + $0x10] sm:$0xff] %vm123, %v121
  %127 = vst.msk [vmem:[%s2 + $0x18] sm:$0xff] %vm123, %v122
  %v128 = vsub.f32 %v10, %v119
  %v129 = vsub.f32 %v11, %v120
  %v130 = vsub.f32 %v12, %v121
  %v131 = vsub.f32 %v13, %v122
  %132 = vst.msk [vmem:[%s1] sm:$0xff] %vm123, %v128
  %133 = vst.msk [vmem:[%s1 + $0x8] sm:$0xff] %vm123, %v129
  %134 = vst.msk [vmem:[%s1 + $0x10] sm:$0xff] %vm123, %v130
  %135 = vst.msk [vmem:[%s1 + $0x18] sm:$0xff] %vm123, %v131
  // Predicated region
  $region6: #{tpu_custom_call.1} parent=0 // pred_check
    _
  $region7: #{tpu_custom_call.1} parent=0 // pred_check_branch
    %137 = sbr.rel (0) target = $region9
  $region8: #{tpu_custom_call.1} parent=0 // pred_region
    _
  $region9: #{tpu_custom_call.1} parent=0 // pred_fallthru
    _
  // Predicated region
  $region10: #{tpu_custom_call.1} parent=0 // pred_check
    _
  $region11: #{tpu_custom_call.1} parent=0 // pred_check_branch
    %139 = sbr.rel (0) target = $region13
  $region12: #{tpu_custom_call.1} parent=0 // pred_region
    _
  $region13: #{tpu_custom_call.1} parent=0 // pred_fallthru
    _
  // Predicated region
  $region14: #{tpu_custom_call.1} parent=0 // pred_check
    _
  $region15: #{tpu_custom_call.1} parent=0 // pred_check_branch
    %141 = sbr.rel (0) target = $region17
  $region16: #{tpu_custom_call.1} parent=0 // pred_region
    _
  $region17: #{tpu_custom_call.1} parent=0 // pred_fallthru
    _
  // Predicated region
  $region18: #{tpu_custom_call.1} parent=0 // pred_check
    _
  $region19: #{tpu_custom_call.1} parent=0 // pred_check_branch
    %143 = sbr.rel (0) target = $region21
  $region20: #{tpu_custom_call.1} parent=0 // pred_region
    _
  $region21: #{tpu_custom_call.1} parent=0 // pred_fallthru
    _

</llo_original>
